<compile_context>
chip_gen: v7x
topology: tpu7x:2x2x1
jax: 0.10.0
libtpu: 0.0.40
codegen_flags: <defaults>
</compile_context>

<pallas_src>
import functools

import jax
import jax.numpy as jnp
from jax.experimental import pallas as pl
from jax.experimental.pallas import tpu as pltpu


def _logsigmoid(x):
    # numerically-stable log(sigmoid(x)) = min(x, 0) - log1p(exp(-|x|))
    return jnp.minimum(x, 0.0) - jnp.log1p(jnp.exp(-jnp.abs(x)))


def _round_up(x, m):
    return (x + m - 1) // m * m


def dw_loss_kernel(center_ref, ctx_ref, neg_ref, out_ref, *, n_neg, true_b, tile_b):
    # center_ref / ctx_ref : (D, TB)     -- B lane-dense
    # neg_ref              : (N, D, TB)
    # out_ref              : (1, 8, 128) -- per-tile partial sum (broadcast)
    c = center_ref[...].astype(jnp.float32)
    x = ctx_ref[...].astype(jnp.float32)

    # positive score per pair: sublane reduce over D -> (1, TB)
    score_pos = jnp.sum(c * x, axis=0, keepdims=True)
    loss = -_logsigmoid(score_pos)                                 # (1, TB)

    # fused per-negative multiply-reduce; only a (D, TB) temp is ever live
    for j in range(n_neg):
        nj = neg_ref[j].astype(jnp.float32)                        # (D, TB)
        s = jnp.sum(c * nj, axis=0, keepdims=True)                 # (1, TB)
        loss = loss - _logsigmoid(-s)

    # mask padded batch lanes so the mean is unbiased
    lane = (jax.lax.broadcasted_iota(jnp.int32, (1, tile_b), 1)
            + pl.program_id(0) * tile_b)
    loss = jnp.where(lane < true_b, loss, 0.0)

    out_ref[...] = jnp.full((1, 8, 128), jnp.sum(loss), dtype=jnp.float32)


def dw_forward_loss(center_w, context_w, pairs, negs):
    """Replicates modeler_DW.forward. pairs: (B,2) int32, negs: (B,N) int32."""
    B = pairs.shape[0]
    N = negs.shape[1]
    D = center_w.shape[1]
    itemsize = jnp.dtype(center_w.dtype).itemsize

    # --- tile sizing: keep double-buffered input bytes <= ~24 MiB so the same
    #     tile fits v5e/v6e (128 MiB) and v7x (64 MiB) VMEM with headroom.
    per_b_bytes = D * (N + 2) * itemsize
    tb_cap = max(128, ((24 << 20) // (2 * per_b_bytes)) // 128 * 128)
    tile_b = min(4096, tb_cap, _round_up(B, 128))
    b_pad = _round_up(B, tile_b)
    num_tiles = b_pad // tile_b

    # --- gather (glue) + pad indices + layout plumbing to lane-dense (B on lanes)
    c_idx = jnp.pad(pairs[:, 0], (0, b_pad - B))
    x_idx = jnp.pad(pairs[:, 1], (0, b_pad - B))
    n_idx = jnp.pad(negs, ((0, b_pad - B), (0, 0)))

    emb_c = jnp.transpose(center_w[c_idx])                  # (D, B_pad)  native dtype
    emb_x = jnp.transpose(context_w[x_idx])                 # (D, B_pad)
    emb_n = jnp.transpose(context_w[n_idx], (1, 2, 0))      # (N, D, B_pad)

    kernel = functools.partial(dw_loss_kernel, n_neg=N, true_b=B, tile_b=tile_b)

    cost = pl.CostEstimate(
        flops=2 * B * (N + 1) * D + 6 * B * (N + 1),
        transcendentals=2 * B * (N + 1),
        bytes_accessed=b_pad * (N + 2) * D * itemsize + num_tiles * 8 * 128 * 4,
    )
    vmem_bytes = int(min(max(2 * tile_b * per_b_bytes + (4 << 20), 16 << 20), 48 << 20))

    partials = pl.pallas_call(
        kernel,
        out_shape=jax.ShapeDtypeStruct((num_tiles, 8, 128), jnp.float32),
        grid=(num_tiles,),
        in_specs=[
            pl.BlockSpec((D, tile_b), lambda i: (0, i)),
            pl.BlockSpec((D, tile_b), lambda i: (0, i)),
            pl.BlockSpec((N, D, tile_b), lambda i: (0, 0, i)),
        ],
        out_specs=pl.BlockSpec((1, 8, 128), lambda i: (i, 0, 0)),
        compiler_params=pltpu.CompilerParams(
            dimension_semantics=("parallel",),
            vmem_limit_bytes=vmem_bytes,
        ),
        cost_estimate=cost,
    )(emb_c, emb_x, emb_n)

    # per-tile partial sums -> mean over the TRUE batch size
    return jnp.sum(partials[:, 0, 0]) / B


def init_weights(key, num_nodes, dim):
    """nn.init.normal_(std=0.01) followed by row-wise max(norm, 1.0) clipping."""
    k1, k2 = jax.random.split(key)

    def make(k):
        w = 0.01 * jax.random.normal(k, (num_nodes, dim), dtype=jnp.float32)
        norm = jnp.sqrt(jnp.sum(w * w, axis=1, keepdims=True))
        return w / jnp.maximum(norm, 1.0)

    return make(k1), make(k2)


if __name__ == "__main__":
    num_nodes = 64
    dim = 32
    batch = 8
    n_neg = 8

    key = jax.random.PRNGKey(0)
    k_w, k_pairs, k_negs = jax.random.split(key, 3)

    center_w, context_w = init_weights(k_w, num_nodes, dim)
    pairs = jax.random.randint(k_pairs, (batch, 2), 0, num_nodes, dtype=jnp.int32)
    negs = jax.random.randint(k_negs, (batch, n_neg), 0, num_nodes, dtype=jnp.int32)

    loss = dw_forward_loss(center_w, context_w, pairs, negs)
    loss = jax.block_until_ready(loss)

    # pure-JAX reference check
    ec = center_w[pairs[:, 0]]
    ex = context_w[pairs[:, 1]]
    en = context_w[negs]
    sp = jnp.sum(ec * ex, axis=-1)
    sn = jnp.einsum('bd,bnd->bn', ec, en)
    ls = lambda x: jnp.minimum(x, 0.0) - jnp.log1p(jnp.exp(-jnp.abs(x)))
    ref = jnp.mean(-ls(sp) - jnp.sum(ls(-sn), axis=-1))
    assert jnp.allclose(loss, ref, atol=1e-5, rtol=1e-5), (loss, ref)

    print("KERNEL_OK")
</pallas_src>

<mosaic_0001>
module attributes {stable_mosaic.version = 11 : i64} {
  func.func @dw_loss_kernel(%arg0: i32, %arg1: memref<32x128xf32, #tpu.memory_space<vmem>>, %arg2: memref<32x128xf32, #tpu.memory_space<vmem>>, %arg3: memref<8x32x128xf32, #tpu.memory_space<vmem>>, %arg4: memref<1x8x128xf32, #tpu.memory_space<vmem>>) attributes {dimension_semantics = [#tpu.dimension_semantics<parallel>], iteration_bounds = array<i64: 1>, scalar_prefetch = 0 : i64, scratch_operands = 0 : i64, tpu.core_type = #tpu.core_type<tc>, window_params = [{transform_indices = @transform_0, window_bounds = array<i64: 32, 128>}, {transform_indices = @transform_1, window_bounds = array<i64: 32, 128>}, {transform_indices = @transform_2, window_bounds = array<i64: 8, 32, 128>}, {transform_indices = @transform_3, window_bounds = array<i64: 1, 8, 128>}]} {
    %c0 = arith.constant 0 : index
    %c0_0 = arith.constant 0 : index
    %0 = vector.load %arg1[%c0, %c0_0] : memref<32x128xf32, #tpu.memory_space<vmem>>, vector<32x128xf32>
    %c0_1 = arith.constant 0 : index
    %c0_2 = arith.constant 0 : index
    %1 = vector.load %arg2[%c0_1, %c0_2] : memref<32x128xf32, #tpu.memory_space<vmem>>, vector<32x128xf32>
    %2 = arith.mulf %0, %1 : vector<32x128xf32>
    %cst = arith.constant dense<0.000000e+00> : vector<128xf32>
    %3 = vector.multi_reduction <add>, %2, %cst [0] : vector<32x128xf32> to vector<128xf32>
    %4 = vector.shape_cast %3 : vector<128xf32> to vector<1x128xf32>
    %cst_3 = arith.constant 0.000000e+00 : f32
    %5 = vector.broadcast %cst_3 : f32 to vector<1x128xf32>
    %6 = arith.minimumf %4, %5 : vector<1x128xf32>
    %7 = math.absf %4 : vector<1x128xf32>
    %cst_4 = arith.constant 0.000000e+00 : f32
    %8 = vector.broadcast %cst_4 : f32 to vector<1x128xf32>
    %9 = arith.subf %8, %7 : vector<1x128xf32>
    %10 = math.exp %9 : vector<1x128xf32>
    %11 = math.log1p %10 : vector<1x128xf32>
    %12 = arith.subf %6, %11 : vector<1x128xf32>
    %cst_5 = arith.constant 0.000000e+00 : f32
    %13 = vector.broadcast %cst_5 : f32 to vector<1x128xf32>
    %14 = arith.subf %13, %12 : vector<1x128xf32>
    %c0_6 = arith.constant 0 : index
    %c0_7 = arith.constant 0 : index
    %c0_8 = arith.constant 0 : index
    %15 = vector.load %arg3[%c0_6, %c0_7, %c0_8] : memref<8x32x128xf32, #tpu.memory_space<vmem>>, vector<1x32x128xf32>
    %16 = vector.shape_cast %15 : vector<1x32x128xf32> to vector<32x128xf32>
    %17 = arith.mulf %0, %16 : vector<32x128xf32>
    %cst_9 = arith.constant dense<0.000000e+00> : vector<128xf32>
    %18 = vector.multi_reduction <add>, %17, %cst_9 [0] : vector<32x128xf32> to vector<128xf32>
    %19 = vector.shape_cast %18 : vector<128xf32> to vector<1x128xf32>
    %cst_10 = arith.constant 0.000000e+00 : f32
    %20 = vector.broadcast %cst_10 : f32 to vector<1x128xf32>
    %21 = arith.subf %20, %19 : vector<1x128xf32>
    %cst_11 = arith.constant 0.000000e+00 : f32
    %22 = vector.broadcast %cst_11 : f32 to vector<1x128xf32>
    %23 = arith.minimumf %21, %22 : vector<1x128xf32>
    %24 = math.absf %21 : vector<1x128xf32>
    %cst_12 = arith.constant 0.000000e+00 : f32
    %25 = vector.broadcast %cst_12 : f32 to vector<1x128xf32>
    %26 = arith.subf %25, %24 : vector<1x128xf32>
    %27 = math.exp %26 : vector<1x128xf32>
    %28 = math.log1p %27 : vector<1x128xf32>
    %29 = arith.subf %23, %28 : vector<1x128xf32>
    %30 = arith.subf %14, %29 : vector<1x128xf32>
    %c1 = arith.constant 1 : index
    %c0_13 = arith.constant 0 : index
    %c0_14 = arith.constant 0 : index
    %31 = vector.load %arg3[%c1, %c0_13, %c0_14] : memref<8x32x128xf32, #tpu.memory_space<vmem>>, vector<1x32x128xf32>
    %32 = vector.shape_cast %31 : vector<1x32x128xf32> to vector<32x128xf32>
    %33 = arith.mulf %0, %32 : vector<32x128xf32>
    %cst_15 = arith.constant dense<0.000000e+00> : vector<128xf32>
    %34 = vector.multi_reduction <add>, %33, %cst_15 [0] : vector<32x128xf32> to vector<128xf32>
    %35 = vector.shape_cast %34 : vector<128xf32> to vector<1x128xf32>
    %cst_16 = arith.constant 0.000000e+00 : f32
    %36 = vector.broadcast %cst_16 : f32 to vector<1x128xf32>
    %37 = arith.subf %36, %35 : vector<1x128xf32>
    %cst_17 = arith.constant 0.000000e+00 : f32
    %38 = vector.broadcast %cst_17 : f32 to vector<1x128xf32>
    %39 = arith.minimumf %37, %38 : vector<1x128xf32>
    %40 = math.absf %37 : vector<1x128xf32>
    %cst_18 = arith.constant 0.000000e+00 : f32
    %41 = vector.broadcast %cst_18 : f32 to vector<1x128xf32>
    %42 = arith.subf %41, %40 : vector<1x128xf32>
    %43 = math.exp %42 : vector<1x128xf32>
    %44 = math.log1p %43 : vector<1x128xf32>
    %45 = arith.subf %39, %44 : vector<1x128xf32>
    %46 = arith.subf %30, %45 : vector<1x128xf32>
    %c2 = arith.constant 2 : index
    %c0_19 = arith.constant 0 : index
    %c0_20 = arith.constant 0 : index
    %47 = vector.load %arg3[%c2, %c0_19, %c0_20] : memref<8x32x128xf32, #tpu.memory_space<vmem>>, vector<1x32x128xf32>
    %48 = vector.shape_cast %47 : vector<1x32x128xf32> to vector<32x128xf32>
    %49 = arith.mulf %0, %48 : vector<32x128xf32>
    %cst_21 = arith.constant dense<0.000000e+00> : vector<128xf32>
    %50 = vector.multi_reduction <add>, %49, %cst_21 [0] : vector<32x128xf32> to vector<128xf32>
    %51 = vector.shape_cast %50 : vector<128xf32> to vector<1x128xf32>
    %cst_22 = arith.constant 0.000000e+00 : f32
    %52 = vector.broadcast %cst_22 : f32 to vector<1x128xf32>
    %53 = arith.subf %52, %51 : vector<1x128xf32>
    %cst_23 = arith.constant 0.000000e+00 : f32
    %54 = vector.broadcast %cst_23 : f32 to vector<1x128xf32>
    %55 = arith.minimumf %53, %54 : vector<1x128xf32>
    %56 = math.absf %53 : vector<1x128xf32>
    %cst_24 = arith.constant 0.000000e+00 : f32
    %57 = vector.broadcast %cst_24 : f32 to vector<1x128xf32>
    %58 = arith.subf %57, %56 : vector<1x128xf32>
    %59 = math.exp %58 : vector<1x128xf32>
    %60 = math.log1p %59 : vector<1x128xf32>
    %61 = arith.subf %55, %60 : vector<1x128xf32>
    %62 = arith.subf %46, %61 : vector<1x128xf32>
    %c3 = arith.constant 3 : index
    %c0_25 = arith.constant 0 : index
    %c0_26 = arith.constant 0 : index
    %63 = vector.load %arg3[%c3, %c0_25, %c0_26] : memref<8x32x128xf32, #tpu.memory_space<vmem>>, vector<1x32x128xf32>
    %64 = vector.shape_cast %63 : vector<1x32x128xf32> to vector<32x128xf32>
    %65 = arith.mulf %0, %64 : vector<32x128xf32>
    %cst_27 = arith.constant dense<0.000000e+00> : vector<128xf32>
    %66 = vector.multi_reduction <add>, %65, %cst_27 [0] : vector<32x128xf32> to vector<128xf32>
    %67 = vector.shape_cast %66 : vector<128xf32> to vector<1x128xf32>
    %cst_28 = arith.constant 0.000000e+00 : f32
    %68 = vector.broadcast %cst_28 : f32 to vector<1x128xf32>
    %69 = arith.subf %68, %67 : vector<1x128xf32>
    %cst_29 = arith.constant 0.000000e+00 : f32
    %70 = vector.broadcast %cst_29 : f32 to vector<1x128xf32>
    %71 = arith.minimumf %69, %70 : vector<1x128xf32>
    %72 = math.absf %69 : vector<1x128xf32>
    %cst_30 = arith.constant 0.000000e+00 : f32
    %73 = vector.broadcast %cst_30 : f32 to vector<1x128xf32>
    %74 = arith.subf %73, %72 : vector<1x128xf32>
    %75 = math.exp %74 : vector<1x128xf32>
    %76 = math.log1p %75 : vector<1x128xf32>
    %77 = arith.subf %71, %76 : vector<1x128xf32>
    %78 = arith.subf %62, %77 : vector<1x128xf32>
    %c4 = arith.constant 4 : index
    %c0_31 = arith.constant 0 : index
    %c0_32 = arith.constant 0 : index
    %79 = vector.load %arg3[%c4, %c0_31, %c0_32] : memref<8x32x128xf32, #tpu.memory_space<vmem>>, vector<1x32x128xf32>
    %80 = vector.shape_cast %79 : vector<1x32x128xf32> to vector<32x128xf32>
    %81 = arith.mulf %0, %80 : vector<32x128xf32>
    %cst_33 = arith.constant dense<0.000000e+00> : vector<128xf32>
    %82 = vector.multi_reduction <add>, %81, %cst_33 [0] : vector<32x128xf32> to vector<128xf32>
    %83 = vector.shape_cast %82 : vector<128xf32> to vector<1x128xf32>
    %cst_34 = arith.constant 0.000000e+00 : f32
    %84 = vector.broadcast %cst_34 : f32 to vector<1x128xf32>
    %85 = arith.subf %84, %83 : vector<1x128xf32>
    %cst_35 = arith.constant 0.000000e+00 : f32
    %86 = vector.broadcast %cst_35 : f32 to vector<1x128xf32>
    %87 = arith.minimumf %85, %86 : vector<1x128xf32>
    %88 = math.absf %85 : vector<1x128xf32>
    %cst_36 = arith.constant 0.000000e+00 : f32
    %89 = vector.broadcast %cst_36 : f32 to vector<1x128xf32>
    %90 = arith.subf %89, %88 : vector<1x128xf32>
    %91 = math.exp %90 : vector<1x128xf32>
    %92 = math.log1p %91 : vector<1x128xf32>
    %93 = arith.subf %87, %92 : vector<1x128xf32>
    %94 = arith.subf %78, %93 : vector<1x128xf32>
    %c5 = arith.constant 5 : index
    %c0_37 = arith.constant 0 : index
    %c0_38 = arith.constant 0 : index
    %95 = vector.load %arg3[%c5, %c0_37, %c0_38] : memref<8x32x128xf32, #tpu.memory_space<vmem>>, vector<1x32x128xf32>
    %96 = vector.shape_cast %95 : vector<1x32x128xf32> to vector<32x128xf32>
    %97 = arith.mulf %0, %96 : vector<32x128xf32>
    %cst_39 = arith.constant dense<0.000000e+00> : vector<128xf32>
    %98 = vector.multi_reduction <add>, %97, %cst_39 [0] : vector<32x128xf32> to vector<128xf32>
    %99 = vector.shape_cast %98 : vector<128xf32> to vector<1x128xf32>
    %cst_40 = arith.constant 0.000000e+00 : f32
    %100 = vector.broadcast %cst_40 : f32 to vector<1x128xf32>
    %101 = arith.subf %100, %99 : vector<1x128xf32>
    %cst_41 = arith.constant 0.000000e+00 : f32
    %102 = vector.broadcast %cst_41 : f32 to vector<1x128xf32>
    %103 = arith.minimumf %101, %102 : vector<1x128xf32>
    %104 = math.absf %101 : vector<1x128xf32>
    %cst_42 = arith.constant 0.000000e+00 : f32
    %105 = vector.broadcast %cst_42 : f32 to vector<1x128xf32>
    %106 = arith.subf %105, %104 : vector<1x128xf32>
    %107 = math.exp %106 : vector<1x128xf32>
    %108 = math.log1p %107 : vector<1x128xf32>
    %109 = arith.subf %103, %108 : vector<1x128xf32>
    %110 = arith.subf %94, %109 : vector<1x128xf32>
    %c6 = arith.constant 6 : index
    %c0_43 = arith.constant 0 : index
    %c0_44 = arith.constant 0 : index
    %111 = vector.load %arg3[%c6, %c0_43, %c0_44] : memref<8x32x128xf32, #tpu.memory_space<vmem>>, vector<1x32x128xf32>
    %112 = vector.shape_cast %111 : vector<1x32x128xf32> to vector<32x128xf32>
    %113 = arith.mulf %0, %112 : vector<32x128xf32>
    %cst_45 = arith.constant dense<0.000000e+00> : vector<128xf32>
    %114 = vector.multi_reduction <add>, %113, %cst_45 [0] : vector<32x128xf32> to vector<128xf32>
    %115 = vector.shape_cast %114 : vector<128xf32> to vector<1x128xf32>
    %cst_46 = arith.constant 0.000000e+00 : f32
    %116 = vector.broadcast %cst_46 : f32 to vector<1x128xf32>
    %117 = arith.subf %116, %115 : vector<1x128xf32>
    %cst_47 = arith.constant 0.000000e+00 : f32
    %118 = vector.broadcast %cst_47 : f32 to vector<1x128xf32>
    %119 = arith.minimumf %117, %118 : vector<1x128xf32>
    %120 = math.absf %117 : vector<1x128xf32>
    %cst_48 = arith.constant 0.000000e+00 : f32
    %121 = vector.broadcast %cst_48 : f32 to vector<1x128xf32>
    %122 = arith.subf %121, %120 : vector<1x128xf32>
    %123 = math.exp %122 : vector<1x128xf32>
    %124 = math.log1p %123 : vector<1x128xf32>
    %125 = arith.subf %119, %124 : vector<1x128xf32>
    %126 = arith.subf %110, %125 : vector<1x128xf32>
    %c7 = arith.constant 7 : index
    %c0_49 = arith.constant 0 : index
    %c0_50 = arith.constant 0 : index
    %127 = vector.load %arg3[%c7, %c0_49, %c0_50] : memref<8x32x128xf32, #tpu.memory_space<vmem>>, vector<1x32x128xf32>
    %128 = vector.shape_cast %127 : vector<1x32x128xf32> to vector<32x128xf32>
    %129 = arith.mulf %0, %128 : vector<32x128xf32>
    %cst_51 = arith.constant dense<0.000000e+00> : vector<128xf32>
    %130 = vector.multi_reduction <add>, %129, %cst_51 [0] : vector<32x128xf32> to vector<128xf32>
    %131 = vector.shape_cast %130 : vector<128xf32> to vector<1x128xf32>
    %cst_52 = arith.constant 0.000000e+00 : f32
    %132 = vector.broadcast %cst_52 : f32 to vector<1x128xf32>
    %133 = arith.subf %132, %131 : vector<1x128xf32>
    %cst_53 = arith.constant 0.000000e+00 : f32
    %134 = vector.broadcast %cst_53 : f32 to vector<1x128xf32>
    %135 = arith.minimumf %133, %134 : vector<1x128xf32>
    %136 = math.absf %133 : vector<1x128xf32>
    %cst_54 = arith.constant 0.000000e+00 : f32
    %137 = vector.broadcast %cst_54 : f32 to vector<1x128xf32>
    %138 = arith.subf %137, %136 : vector<1x128xf32>
    %139 = math.exp %138 : vector<1x128xf32>
    %140 = math.log1p %139 : vector<1x128xf32>
    %141 = arith.subf %135, %140 : vector<1x128xf32>
    %142 = arith.subf %126, %141 : vector<1x128xf32>
    %143 = tpu.iota {dimensions = array<i32: 1>} : vector<1x128xi32>
    %c128_i32 = arith.constant 128 : i32
    %144 = arith.muli %arg0, %c128_i32 : i32
    %145 = vector.broadcast %144 : i32 to vector<1x128xi32>
    %146 = arith.addi %143, %145 : vector<1x128xi32>
    %c8_i32 = arith.constant 8 : i32
    %147 = vector.broadcast %c8_i32 : i32 to vector<1x128xi32>
    %148 = arith.cmpi slt, %146, %147 : vector<1x128xi32>
    %cst_55 = arith.constant 0.000000e+00 : f32
    %149 = vector.broadcast %cst_55 : f32 to vector<1x128xf32>
    %150 = arith.select %148, %142, %149 : vector<1x128xi1>, vector<1x128xf32>
    %151 = vector.shape_cast %150 : vector<1x128xf32> to vector<1x1x128xf32>
    %cst_56 = arith.constant dense<0.000000e+00> : vector<1xf32>
    %152 = vector.multi_reduction <add>, %151, %cst_56 [1, 2] : vector<1x1x128xf32> to vector<1xf32>
    %153 = vector.shape_cast %152 : vector<1xf32> to vector<1x1x1xf32>
    %154 = vector.extract %153[0, 0, 0] : f32 from vector<1x1x1xf32>
    %155 = vector.broadcast %154 : f32 to vector<1x8x128xf32>
    %c0_57 = arith.constant 0 : index
    %c0_58 = arith.constant 0 : index
    %c0_59 = arith.constant 0 : index
    %156 = vector.load %arg4[%c0_57, %c0_58, %c0_59] : memref<1x8x128xf32, #tpu.memory_space<vmem>>, vector<1x8x128xf32>
    tpu.vector_store %arg4[%c0_57, %c0_58, %c0_59], %155 {strides = array<i32>} : memref<1x8x128xf32, #tpu.memory_space<vmem>>, vector<1x8x128xf32>,
    return
  }
  func.func @transform_0(%arg0: i32) -> (i32, i32) {
    %c0_i32 = arith.constant 0 : i32
    %c0_i32_0 = arith.constant 0 : i32
    return %c0_i32, %arg0 : i32, i32
  }
  func.func @transform_1(%arg0: i32) -> (i32, i32) {
    %c0_i32 = arith.constant 0 : i32
    %c0_i32_0 = arith.constant 0 : i32
    return %c0_i32, %arg0 : i32, i32
  }
  func.func @transform_2(%arg0: i32) -> (i32, i32, i32) {
    %c0_i32 = arith.constant 0 : i32
    %c0_i32_0 = arith.constant 0 : i32
    %c0_i32_1 = arith.constant 0 : i32
    return %c0_i32, %c0_i32_0, %arg0 : i32, i32, i32
  }
  func.func @transform_3(%arg0: i32) -> (i32, i32, i32) {
    %c0_i32 = arith.constant 0 : i32
    %c0_i32_0 = arith.constant 0 : i32
    %c0_i32_1 = arith.constant 0 : i32
    return %arg0, %c0_i32, %c0_i32_0 : i32, i32, i32
  }
}

</mosaic_0001>

<llo_original>
// kernel: tpu_custom_call.1
$region0: #{tpu_custom_call.1}
  #allocation0 [shape = 'u32[]', space=smem, size = 0x4, offset = 0x4, fixed_abs, tag = 'smem constant byte address 0x4 - core index']
  #allocation1 [shape = 'u32[144,128]{1,0:T(1,128)}', space=vmem, size = 0x12000, scoped, tag = 'internal scratch']
  %s0 = inlined_call_operand.hbm [shape: f32[32,128], index: 0, kind: input, shape index: {}]
  %s1 = inlined_call_operand.hbm [shape: f32[32,128], index: 1, kind: input, shape index: {}]
  %s2 = inlined_call_operand.hbm [shape: f32[8,32,128], index: 2, kind: input, shape index: {}]
  %s3 = inlined_call_operand.hbm [shape: f32[1,8,128], index: 3, kind: output, shape index: {}]
  %s4 = sld [smem:[#allocation0]]
  $region34: #{tpu_custom_call.1} parent=0
    _
  %s6 = ssub.s32 1, %s4
  %s7 = scalar_select 0, %s6, %s4
  $region1: #{tpu_custom_call.1} parent=0
    #allocation2 [shape = 'u8[16384]{0}', space=vmem, size = 0x4000, scoped, tag = 'input window, operand 0, single buffered']
    #allocation3 [shape = 's32[1]{0}', space=sflag, size = 0x4, scoped, tag = 'scoped memory for tpu_custom_call.1']
    #allocation4 [shape = 's32[1]{0}', space=sflag, size = 0x4, scoped, tag = 'scoped memory for tpu_custom_call.1']
    #allocation5 [shape = 'u8[16384]{0}', space=vmem, size = 0x4000, scoped, tag = 'input window, operand 1, single buffered']
    #allocation6 [shape = 's32[1]{0}', space=sflag, size = 0x4, scoped, tag = 'scoped memory for tpu_custom_call.1']
    #allocation7 [shape = 'u8[131072]{0}', space=vmem, size = 0x20000, scoped, tag = 'input window, operand 2, single buffered']
    #allocation8 [shape = 'u8[4096]{0}', space=vmem, size = 0x1000, scoped, tag = 'output window, operand 0, single buffered']
    %8 = vsyncpa [#allocation3], 0
    %9 = vsyncpa [#allocation6], 0
    %10 = vsyncpa [#allocation4], 0
    // Predicated region
    $region2: #{tpu_custom_call.1} parent=1 // pred_check
      _
    $region3: #{tpu_custom_call.1} parent=1 // pred_check_branch
      %12 = sbr.rel (0) target = $region5
    $region4: #{tpu_custom_call.1} parent=1 // pred_region
      %s14 = ssub.s32 512, 512
      %15 = vsyncadd [#allocation3], %s14
      %s16 = sshll.u32 [#allocation2], 4
      %s17 = int_to_ptr.vmem [resolvable:$true] %s16
      %22 = dma.hbm_to_vmem [thread:$0]  %s0, 512, %s17, [#allocation3], 128, 128, 8
    $region5: #{tpu_custom_call.1} parent=1 // pred_fallthru
      _
    // Predicated region
    $region6: #{tpu_custom_call.1} parent=1 // pred_check
      _
    $region7: #{tpu_custom_call.1} parent=1 // pred_check_branch
      %24 = sbr.rel (0) target = $region9
    $region8: #{tpu_custom_call.1} parent=1 // pred_region
      %s26 = ssub.s32 512, 512
      %27 = vsyncadd [#allocation6], %s26
      %s28 = sshll.u32 [#allocation5], 4
      %s29 = int_to_ptr.vmem [resolvable:$true] %s28
      %34 = dma.hbm_to_vmem [thread:$0]  %s1, 512, %s29, [#allocation6], 128, 128, 8
    $region9: #{tpu_custom_call.1} parent=1 // pred_fallthru
      _
    // Predicated region
    $region10: #{tpu_custom_call.1} parent=1 // pred_check
      _
    $region11: #{tpu_custom_call.1} parent=1 // pred_check_branch
      %36 = sbr.rel (0) target = $region13
    $region12: #{tpu_custom_call.1} parent=1 // pred_region
      %s38 = ssub.s32 4096, 4096
      %39 = vsyncadd [#allocation6], %s38
      %s40 = sshll.u32 [#allocation7], 4
      %s41 = int_to_ptr.vmem [resolvable:$true] %s40
      %46 = dma.hbm_to_vmem [thread:$0]  %s2, 4096, %s41, [#allocation6], 128, 128, 8
    $region13: #{tpu_custom_call.1} parent=1 // pred_fallthru
      _
    // Predicated region
    $region14: #{tpu_custom_call.1} parent=1 // pred_check
      _
    $region15: #{tpu_custom_call.1} parent=1 // pred_check_branch
      %48 = sbr.rel (0) target = $region17
    $region16: #{tpu_custom_call.1} parent=1 // pred_region
      %49 = dma.done [#allocation3], 512
    $region17: #{tpu_custom_call.1} parent=1 // pred_fallthru
      _
    // Predicated region
    $region18: #{tpu_custom_call.1} parent=1 // pred_check
      _
    $region19: #{tpu_custom_call.1} parent=1 // pred_check_branch
      %51 = sbr.rel (0) target = $region21
    $region20: #{tpu_custom_call.1} parent=1 // pred_region
      %52 = dma.done [#allocation6], 512
    $region21: #{tpu_custom_call.1} parent=1 // pred_fallthru
      _
    // Predicated region
    $region22: #{tpu_custom_call.1} parent=1 // pred_check
      _
    $region23: #{tpu_custom_call.1} parent=1 // pred_check_branch
      %54 = sbr.rel (0) target = $region25
    $region24: #{tpu_custom_call.1} parent=1 // pred_region
      %55 = dma.done [#allocation6], 4096
    $region25: #{tpu_custom_call.1} parent=1 // pred_fallthru
      _
    %v56 = vld [vmem:[#allocation2] sm:$0xff]
    %v57 = vld [vmem:[#allocation2 + $0x8] sm:$0xff]
    %v58 = vld [vmem:[#allocation2 + $0x10] sm:$0xff]
    %v59 = vld [vmem:[#allocation2 + $0x18] sm:$0xff]
    %v60 = vld [vmem:[#allocation5] sm:$0xff]
    %v61 = vld [vmem:[#allocation5 + $0x8] sm:$0xff]
    %v62 = vld [vmem:[#allocation5 + $0x10] sm:$0xff]
    %v63 = vld [vmem:[#allocation5 + $0x18] sm:$0xff]
    %v64 = vmul.f32 %v56, %v60
    %v65 = vmul.f32 %v57, %v61
    %v66 = vmul.f32 %v58, %v62
    %v67 = vmul.f32 %v59, %v63
    %v68 = vadd.f32 %v64, %v65
    %v69 = vadd.f32 %v68, %v66
    %v70 = vadd.f32 %v69, %v67
    %v71 = vrot.slane %v70, 4
    %v72 = vadd.f32 %v70, %v71
    %v73 = vrot.slane %v72, 2
    %v74 = vadd.f32 %v72, %v73
    %v75 = vrot.slane %v74, 1
    %v76 = vadd.f32 %v74, %v75
    %v77 = vmin.f32 %v76, 0.0
    %v78 = vand.u32 2147483647, %v76
    %v79 = vsub.f32 0.0, %v78
    %v80 = vmul.f32 %v79, 1.442695
    %v81 = vpow.pop %v80
    %v82 = vadd.f32 %v81, 1.0
    %v83 = vlog2.pop %v82
    %v84 = vmul.f32 %v83, 0.6931472
    %v85 = vmul.f32 -0.5, %v81
    %v86 = vadd.f32 %v85, 1.0
    %v87 = vmul.f32 %v86, %v81
    %v88 = vand.u32 2147483647, %v81
    %vm89 = vcmp.lt.f32.partialorder %v88, 0.0004427343
    %v90 = vsel %vm89, %v87, %v84
    %v91 = vsub.f32 %v77, %v90
    %v92 = vsub.f32 0.0, %v91
    %v93 = vld [vmem:[#allocation7] sm:$0xff]
    %v94 = vld [vmem:[#allocation7 + $0x8] sm:$0xff]
    %v95 = vld [vmem:[#allocation7 + $0x10] sm:$0xff]
    %v96 = vld [vmem:[#allocation7 + $0x18] sm:$0xff]
    %v97 = vmul.f32 %v56, %v93
    %v98 = vmul.f32 %v57, %v94
    %v99 = vmul.f32 %v58, %v95
    %v100 = vmul.f32 %v59, %v96
    %v101 = vadd.f32 %v97, %v98
    %v102 = vadd.f32 %v101, %v99
    %v103 = vadd.f32 %v102, %v100
    %v104 = vrot.slane %v103, 4
    %v105 = vadd.f32 %v103, %v104
    %v106 = vrot.slane %v105, 2
    %v107 = vadd.f32 %v105, %v106
    %v108 = vrot.slane %v107, 1
    %v109 = vadd.f32 %v107, %v108
    %v110 = vsub.f32 0.0, %v109
    %v111 = vmin.f32 %v110, 0.0
    %v112 = vand.u32 2147483647, %v110
    %v113 = vsub.f32 0.0, %v112
    %v114 = vmul.f32 %v113, 1.442695
    %v115 = vpow.pop %v114
    %v116 = vadd.f32 %v115, 1.0
    %v117 = vlog2.pop %v116
    %v118 = vmul.f32 %v117, 0.6931472
    %v119 = vmul.f32 -0.5, %v115
    %v120 = vadd.f32 %v119, 1.0
    %v121 = vmul.f32 %v120, %v115
    %v122 = vand.u32 2147483647, %v115
    %vm123 = vcmp.lt.f32.partialorder %v122, 0.0004427343
    %v124 = vsel %vm123, %v121, %v118
    %v125 = vsub.f32 %v111, %v124
    %v126 = vsub.f32 %v92, %v125
    %s127 = scalar_lea.vmem [#allocation7], 32
    %v128 = vld [vmem:[%s127] sm:$0xff]
    %v129 = vld [vmem:[%s127 + $0x8] sm:$0xff]
    %v130 = vld [vmem:[%s127 + $0x10] sm:$0xff]
    %v131 = vld [vmem:[%s127 + $0x18] sm:$0xff]
    %v132 = vmul.f32 %v56, %v128
    %v133 = vmul.f32 %v57, %v129
    %v134 = vmul.f32 %v58, %v130
    %v135 = vmul.f32 %v59, %v131
    %v136 = vadd.f32 %v132, %v133
    %v137 = vadd.f32 %v136, %v134
    %v138 = vadd.f32 %v137, %v135
    %v139 = vrot.slane %v138, 4
    %v140 = vadd.f32 %v138, %v139
    %v141 = vrot.slane %v140, 2
    %v142 = vadd.f32 %v140, %v141
    %v143 = vrot.slane %v142, 1
    %v144 = vadd.f32 %v142, %v143
    %v145 = vsub.f32 0.0, %v144
    %v146 = vmin.f32 %v145, 0.0
    %v147 = vand.u32 2147483647, %v145
    %v148 = vsub.f32 0.0, %v147
    %v149 = vmul.f32 %v148, 1.442695
    %v150 = vpow.pop %v149
    %v151 = vadd.f32 %v150, 1.0
    %v152 = vlog2.pop %v151
    %v153 = vmul.f32 %v152, 0.6931472
    %v154 = vmul.f32 -0.5, %v150
    %v155 = vadd.f32 %v154, 1.0
    %v156 = vmul.f32 %v155, %v150
    %v157 = vand.u32 2147483647, %v150
    %vm158 = vcmp.lt.f32.partialorder %v157, 0.0004427343
    %v159 = vsel %vm158, %v156, %v153
    %v160 = vsub.f32 %v146, %v159
    %v161 = vsub.f32 %v126, %v160
    %s162 = scalar_lea.vmem [#allocation7], 64
    %v163 = vld [vmem:[%s162] sm:$0xff]
    %v164 = vld [vmem:[%s162 + $0x8] sm:$0xff]
    %v165 = vld [vmem:[%s162 + $0x10] sm:$0xff]
    %v166 = vld [vmem:[%s162 + $0x18] sm:$0xff]
    %v167 = vmul.f32 %v56, %v163
    %v168 = vmul.f32 %v57, %v164
    %v169 = vmul.f32 %v58, %v165
    %v170 = vmul.f32 %v59, %v166
    %v171 = vadd.f32 %v167, %v168
    %v172 = vadd.f32 %v171, %v169
    %v173 = vadd.f32 %v172, %v170
    %v174 = vrot.slane %v173, 4
    %v175 = vadd.f32 %v173, %v174
    %v176 = vrot.slane %v175, 2
    %v177 = vadd.f32 %v175, %v176
    %v178 = vrot.slane %v177, 1
    %v179 = vadd.f32 %v177, %v178
    %v180 = vsub.f32 0.0, %v179
    %v181 = vmin.f32 %v180, 0.0
    %v182 = vand.u32 2147483647, %v180
    %v183 = vsub.f32 0.0, %v182
    %v184 = vmul.f32 %v183, 1.442695
    %v185 = vpow.pop %v184
    %v186 = vadd.f32 %v185, 1.0
    %v187 = vlog2.pop %v186
    %v188 = vmul.f32 %v187, 0.6931472
    %v189 = vmul.f32 -0.5, %v185
    %v190 = vadd.f32 %v189, 1.0
    %v191 = vmul.f32 %v190, %v185
    %v192 = vand.u32 2147483647, %v185
    %vm193 = vcmp.lt.f32.partialorder %v192, 0.0004427343
    %v194 = vsel %vm193, %v191, %v188
    %v195 = vsub.f32 %v181, %v194
    %v196 = vsub.f32 %v161, %v195
    %s197 = scalar_lea.vmem [#allocation7], 96
    %v198 = vld [vmem:[%s197] sm:$0xff]
    %v199 = vld [vmem:[%s197 + $0x8] sm:$0xff]
    %v200 = vld [vmem:[%s197 + $0x10] sm:$0xff]
    %v201 = vld [vmem:[%s197 + $0x18] sm:$0xff]
    %v202 = vmul.f32 %v56, %v198
    %v203 = vmul.f32 %v57, %v199
    %v204 = vmul.f32 %v58, %v200
    %v205 = vmul.f32 %v59, %v201
    %v206 = vadd.f32 %v202, %v203
    %v207 = vadd.f32 %v206, %v204
    %v208 = vadd.f32 %v207, %v205
    %v209 = vrot.slane %v208, 4
    %v210 = vadd.f32 %v208, %v209
    %v211 = vrot.slane %v210, 2
    %v212 = vadd.f32 %v210, %v211
    %v213 = vrot.slane %v212, 1
    %v214 = vadd.f32 %v212, %v213
    %v215 = vsub.f32 0.0, %v214
    %v216 = vmin.f32 %v215, 0.0
    %v217 = vand.u32 2147483647, %v215
    %v218 = vsub.f32 0.0, %v217
    %v219 = vmul.f32 %v218, 1.442695
    %v220 = vpow.pop %v219
    %v221 = vadd.f32 %v220, 1.0
    %v222 = vlog2.pop %v221
    %v223 = vmul.f32 %v222, 0.6931472
    %v224 = vmul.f32 -0.5, %v220
    %v225 = vadd.f32 %v224, 1.0
    %v226 = vmul.f32 %v225, %v220
    %v227 = vand.u32 2147483647, %v220
    %vm228 = vcmp.lt.f32.partialorder %v227, 0.0004427343
    %v229 = vsel %vm228, %v226, %v223
    %v230 = vsub.f32 %v216, %v229
    %v231 = vsub.f32 %v196, %v230
    %s232 = scalar_lea.vmem [#allocation7], 128
    %v233 = vld [vmem:[%s232] sm:$0xff]
    %v234 = vld [vmem:[%s232 + $0x8] sm:$0xff]
    %v235 = vld [vmem:[%s232 + $0x10] sm:$0xff]
    %v236 = vld [vmem:[%s232 + $0x18] sm:$0xff]
    %v237 = vmul.f32 %v56, %v233
    %v238 = vmul.f32 %v57, %v234
    %v239 = vmul.f32 %v58, %v235
    %v240 = vmul.f32 %v59, %v236
    %v241 = vadd.f32 %v237, %v238
    %v242 = vadd.f32 %v241, %v239
    %v243 = vadd.f32 %v242, %v240
    %v244 = vrot.slane %v243, 4
    %v245 = vadd.f32 %v243, %v244
    %v246 = vrot.slane %v245, 2
    %v247 = vadd.f32 %v245, %v246
    %v248 = vrot.slane %v247, 1
    %v249 = vadd.f32 %v247, %v248
    %v250 = vsub.f32 0.0, %v249
    %v251 = vmin.f32 %v250, 0.0
    %v252 = vand.u32 2147483647, %v250
    %v253 = vsub.f32 0.0, %v252
    %v254 = vmul.f32 %v253, 1.442695
    %v255 = vpow.pop %v254
    %v256 = vadd.f32 %v255, 1.0
    %v257 = vlog2.pop %v256
    %v258 = vmul.f32 %v257, 0.6931472
    %v259 = vmul.f32 -0.5, %v255
    %v260 = vadd.f32 %v259, 1.0
    %v261 = vmul.f32 %v260, %v255
    %v262 = vand.u32 2147483647, %v255
    %vm263 = vcmp.lt.f32.partialorder %v262, 0.0004427343
    %v264 = vsel %vm263, %v261, %v258
    %v265 = vsub.f32 %v251, %v264
    %v266 = vsub.f32 %v231, %v265
    %s267 = scalar_lea.vmem [#allocation7], 160
    %v268 = vld [vmem:[%s267] sm:$0xff]
    %v269 = vld [vmem:[%s267 + $0x8] sm:$0xff]
    %v270 = vld [vmem:[%s267 + $0x10] sm:$0xff]
    %v271 = vld [vmem:[%s267 + $0x18] sm:$0xff]
    %v272 = vmul.f32 %v56, %v268
    %v273 = vmul.f32 %v57, %v269
    %v274 = vmul.f32 %v58, %v270
    %v275 = vmul.f32 %v59, %v271
    %v276 = vadd.f32 %v272, %v273
    %v277 = vadd.f32 %v276, %v274
    %v278 = vadd.f32 %v277, %v275
    %v279 = vrot.slane %v278, 4
    %v280 = vadd.f32 %v278, %v279
    %v281 = vrot.slane %v280, 2
    %v282 = vadd.f32 %v280, %v281
    %v283 = vrot.slane %v282, 1
    %v284 = vadd.f32 %v282, %v283
    %v285 = vsub.f32 0.0, %v284
    %v286 = vmin.f32 %v285, 0.0
    %v287 = vand.u32 2147483647, %v285
    %v288 = vsub.f32 0.0, %v287
    %v289 = vmul.f32 %v288, 1.442695
    %v290 = vpow.pop %v289
    %v291 = vadd.f32 %v290, 1.0
    %v292 = vlog2.pop %v291
    %v293 = vmul.f32 %v292, 0.6931472
    %v294 = vmul.f32 -0.5, %v290
    %v295 = vadd.f32 %v294, 1.0
    %v296 = vmul.f32 %v295, %v290
    %v297 = vand.u32 2147483647, %v290
    %vm298 = vcmp.lt.f32.partialorder %v297, 0.0004427343
    %v299 = vsel %vm298, %v296, %v293
    %v300 = vsub.f32 %v286, %v299
    %v301 = vsub.f32 %v266, %v300
    %s302 = scalar_lea.vmem [#allocation7], 192
    %v303 = vld [vmem:[%s302] sm:$0xff]
    %v304 = vld [vmem:[%s302 + $0x8] sm:$0xff]
    %v305 = vld [vmem:[%s302 + $0x10] sm:$0xff]
    %v306 = vld [vmem:[%s302 + $0x18] sm:$0xff]
    %v307 = vmul.f32 %v56, %v303
    %v308 = vmul.f32 %v57, %v304
    %v309 = vmul.f32 %v58, %v305
    %v310 = vmul.f32 %v59, %v306
    %v311 = vadd.f32 %v307, %v308
    %v312 = vadd.f32 %v311, %v309
    %v313 = vadd.f32 %v312, %v310
    %v314 = vrot.slane %v313, 4
    %v315 = vadd.f32 %v313, %v314
    %v316 = vrot.slane %v315, 2
    %v317 = vadd.f32 %v315, %v316
    %v318 = vrot.slane %v317, 1
    %v319 = vadd.f32 %v317, %v318
    %v320 = vsub.f32 0.0, %v319
    %v321 = vmin.f32 %v320, 0.0
    %v322 = vand.u32 2147483647, %v320
    %v323 = vsub.f32 0.0, %v322
    %v324 = vmul.f32 %v323, 1.442695
    %v325 = vpow.pop %v324
    %v326 = vadd.f32 %v325, 1.0
    %v327 = vlog2.pop %v326
    %v328 = vmul.f32 %v327, 0.6931472
    %v329 = vmul.f32 -0.5, %v325
    %v330 = vadd.f32 %v329, 1.0
    %v331 = vmul.f32 %v330, %v325
    %v332 = vand.u32 2147483647, %v325
    %vm333 = vcmp.lt.f32.partialorder %v332, 0.0004427343
    %v334 = vsel %vm333, %v331, %v328
    %v335 = vsub.f32 %v321, %v334
    %v336 = vsub.f32 %v301, %v335
    %s337 = scalar_lea.vmem [#allocation7], 224
    %v338 = vld [vmem:[%s337] sm:$0xff]
    %v339 = vld [vmem:[%s337 + $0x8] sm:$0xff]
    %v340 = vld [vmem:[%s337 + $0x10] sm:$0xff]
    %v341 = vld [vmem:[%s337 + $0x18] sm:$0xff]
    %v342 = vmul.f32 %v56, %v338
    %v343 = vmul.f32 %v57, %v339
    %v344 = vmul.f32 %v58, %v340
    %v345 = vmul.f32 %v59, %v341
    %v346 = vadd.f32 %v342, %v343
    %v347 = vadd.f32 %v346, %v344
    %v348 = vadd.f32 %v347, %v345
    %v349 = vrot.slane %v348, 4
    %v350 = vadd.f32 %v348, %v349
    %v351 = vrot.slane %v350, 2
    %v352 = vadd.f32 %v350, %v351
    %v353 = vrot.slane %v352, 1
    %v354 = vadd.f32 %v352, %v353
    %v355 = vsub.f32 0.0, %v354
    %v356 = vmin.f32 %v355, 0.0
    %v357 = vand.u32 2147483647, %v355
    %v358 = vsub.f32 0.0, %v357
    %v359 = vmul.f32 %v358, 1.442695
    %v360 = vpow.pop %v359
    %v361 = vadd.f32 %v360, 1.0
    %v362 = vlog2.pop %v361
    %v363 = vmul.f32 %v362, 0.6931472
    %v364 = vmul.f32 -0.5, %v360
    %v365 = vadd.f32 %v364, 1.0
    %v366 = vmul.f32 %v365, %v360
    %v367 = vand.u32 2147483647, %v360
    %vm368 = vcmp.lt.f32.partialorder %v367, 0.0004427343
    %v369 = vsel %vm368, %v366, %v363
    %v370 = vsub.f32 %v356, %v369
    %v371 = vsub.f32 %v336, %v370
    %v372 = vlaneseq
    %v373 = vand.u32 %v372, 127
    %s374 = smul.u32 0, 128
    %v375 = vstv %s374
    %v376 = vadd.s32 %v373, %v375
    %vm377 = vcmp.lt.s32.totalorder %v376, 8
    %v378 = vsel %vm377, %v371, 0.0
    %vm379 = vcmask 1040384
    %v380 = vsel %vm379, %v378, 0.0
    %381 = vadd.xlane.f32.xlu0 %v380
    %v382 = vpop.xlane.xlu0 %381
    %v383 = vrot.slane %v382, 4
    %v384 = vadd.f32 %v382, %v383
    %v385 = vrot.slane %v384, 2
    %v386 = vadd.f32 %v384, %v385
    %v387 = vrot.slane %v386, 1
    %v388 = vadd.f32 %v386, %v387
    %s389 = vtos %v388
    %v390 = vstv %s389
    %391 = vst [vmem:[#allocation8] sm:$0xff] %v390
    // Predicated region
    $region26: #{tpu_custom_call.1} parent=1 // pred_check
      _
    $region27: #{tpu_custom_call.1} parent=1 // pred_check_branch
      %393 = sbr.rel (0) target = $region29
    $region28: #{tpu_custom_call.1} parent=1 // pred_region
      %s395 = ssub.s32 128, 128
      %396 = vsyncadd [#allocation4], %s395
      %s398 = sshll.u32 [#allocation8], 4
      %s399 = int_to_ptr.vmem [resolvable:$true] %s398
      %401 = dma.vmem_to_hbm [thread:$0]  %s399, 128, %s3, [#allocation4]
    $region29: #{tpu_custom_call.1} parent=1 // pred_fallthru
      _
    // Predicated region
    $region30: #{tpu_custom_call.1} parent=1 // pred_check
      _
    $region31: #{tpu_custom_call.1} parent=1 // pred_check_branch
      %403 = sbr.rel (0) target = $region33
    $region32: #{tpu_custom_call.1} parent=1 // pred_region
      %404 = dma.done [#allocation4], 128
    $region33: #{tpu_custom_call.1} parent=1 // pred_fallthru
      _
    %405 = vsyncpa [#allocation3], 1
    %406 = vsyncpa [#allocation6], 1
    %407 = vsyncpa [#allocation4], 1

</llo_original>
